<compile_context>
chip_gen: v6e
topology: v6e:2x2x1
jax: 0.10.0
libtpu: 0.0.40
codegen_flags: <defaults>
</compile_context>

<pallas_src>
import jax
import jax.numpy as jnp
from jax.experimental import pallas as pl
from jax.experimental.pallas import tpu as pltpu


_LANE = 128
_EPS = 1e-6
# 48 MiB is safely below physical VMEM on every chip (v5e/v6e 128 MiB, v7x 64 MiB)
# while comfortably above the default scoped limits (16/32 MiB).
_VMEM_LIMIT_BYTES = 48 * 1024 * 1024
# If the estimated per-step residency of the whole-slab path exceeds this,
# fall back to the HW-tiled two-pass kernels.
_SLAB_BUDGET_BYTES = 40 * 1024 * 1024


def _grn_slab_kernel(x_ref, gamma_ref, beta_ref, o_ref):
    # x_ref: (1, C, HWp) one batch element; gamma/beta: (1, C, 1).
    # NOTE: for tiny C (< 8 for f32 / < 16 for bf16) the sublane axis is mostly
    # padding — fine for correctness, only matters for very small channel counts.
    x = x_ref[...]                                   # keep native dtype (bf16 stays bf16)
    xf = x.astype(jnp.float32)

    # Per-channel ||x||_2 over the spatial (lane) axis, accumulated in f32.
    sumsq = jnp.sum(xf * xf, axis=-1, keepdims=True)            # (1, C, 1)
    gx = jnp.sqrt(sumsq)                                        # (1, C, 1)
    gx_mean = jnp.mean(gx, axis=1, keepdims=True)               # (1, 1, 1)
    nx = gx / (gx_mean + _EPS)                                  # (1, C, 1)

    gamma = gamma_ref[...].astype(jnp.float32)
    beta = beta_ref[...].astype(jnp.float32)

    # Fused epilogue: gamma*(x*nx) + beta + x == x*(gamma*nx + 1) + beta
    # -> one mul + one add per element instead of two of each.
    coeff = (gamma * nx + 1.0).astype(x.dtype)                  # (1, C, 1)
    o_ref[...] = (x * coeff + beta.astype(x.dtype)).astype(o_ref.dtype)


def _grn_sumsq_kernel(x_ref, ss_ref):
    # Pass 1 of the tiled fallback: accumulate per-channel sum of squares.
    # x_ref: (1, C, tile_hw); ss_ref: (1, C, 1) f32 accumulator (same output
    # block across the HW grid axis).
    @pl.when(pl.program_id(1) == 0)
    def _():
        ss_ref[...] = jnp.zeros_like(ss_ref)

    xf = x_ref[...].astype(jnp.float32)
    ss_ref[...] += jnp.sum(xf * xf, axis=-1, keepdims=True)


def _grn_apply_kernel(x_ref, coeff_ref, beta_ref, o_ref):
    # Pass 2 of the tiled fallback: out = x * coeff + beta (native dtype).
    o_ref[...] = (x_ref[...] * coeff_ref[...] + beta_ref[...]).astype(o_ref.dtype)


def grn_pallas(x_nchw, gamma, beta):
    """GRN forward.

    Args:
      x_nchw: (N, C, H, W) array.
      gamma:  (1, C, 1, 1) array.
      beta:   (1, C, 1, 1) array.
    Returns:
      (N, C, H, W) array, same dtype as x_nchw.
    """
    N, C, H, W = x_nchw.shape
    HW = H * W
    dtype = x_nchw.dtype
    itemsize = jnp.dtype(dtype).itemsize

    # Lane-dense output: pad the flattened spatial axis to a multiple of 128 so
    # loads/stores are unmasked. Zero padding keeps the L2 norm exact.
    HWp = ((HW + _LANE - 1) // _LANE) * _LANE
    x = x_nchw.reshape(N, C, HW)
    if HWp != HW:
        x = jnp.pad(x, ((0, 0), (0, 0), (0, HWp - HW)))
    g = gamma.reshape(1, C, 1)
    b = beta.reshape(1, C, 1)

    # Estimated per-step VMEM residency for the whole-slab path:
    # double-buffered input + output slabs (native dtype) + f32 temporaries.
    slab_bytes = C * HWp * (4 * itemsize + 8)

    if slab_bytes <= _SLAB_BUDGET_BYTES:
        out = pl.pallas_call(
            _grn_slab_kernel,
            out_shape=jax.ShapeDtypeStruct((N, C, HWp), dtype),
            grid_spec=pltpu.PrefetchScalarGridSpec(
                num_scalar_prefetch=0,
                grid=(N,),
                in_specs=[
                    pl.BlockSpec((1, C, HWp), lambda n: (n, 0, 0)),
                    pl.BlockSpec((1, C, 1), lambda n: (0, 0, 0)),
                    pl.BlockSpec((1, C, 1), lambda n: (0, 0, 0)),
                ],
                out_specs=pl.BlockSpec((1, C, HWp), lambda n: (n, 0, 0)),
            ),
            compiler_params=pltpu.CompilerParams(
                dimension_semantics=("parallel",),
                vmem_limit_bytes=_VMEM_LIMIT_BYTES,
            ),
        )(x, g, b)
    else:
        # ---- Tiled two-pass fallback (slab would not fit VMEM, esp. v7x). ----
        # Pick the largest HW tile that divides HWp and keeps per-step VMEM small.
        tile_hw = _LANE
        for cand in (4096, 2048, 1024, 512, 256, 128):
            if HWp % cand == 0 and C * cand * (4 * itemsize + 8) <= 8 * 1024 * 1024:
                tile_hw = cand
                break
        n_tiles = HWp // tile_hw

        # Pass 1: per-(batch, channel) sum of squares in f32.
        sumsq = pl.pallas_call(
            _grn_sumsq_kernel,
            out_shape=jax.ShapeDtypeStruct((N, C, 1), jnp.float32),
            grid_spec=pltpu.PrefetchScalarGridSpec(
                num_scalar_prefetch=0,
                grid=(N, n_tiles),
                in_specs=[pl.BlockSpec((1, C, tile_hw), lambda n, t: (n, 0, t))],
                out_specs=pl.BlockSpec((1, C, 1), lambda n, t: (n, 0, 0)),
            ),
            compiler_params=pltpu.CompilerParams(
                dimension_semantics=("parallel", "arbitrary"),
                vmem_limit_bytes=_VMEM_LIMIT_BYTES,
            ),
        )(x)

        # Tiny (N, C, 1) per-channel math — negligible, do it in plain JAX.
        gx = jnp.sqrt(sumsq)
        nx = gx / (jnp.mean(gx, axis=1, keepdims=True) + _EPS)
        coeff = (g.astype(jnp.float32) * nx + 1.0).astype(dtype)   # (N, C, 1)
        beta_c = b.astype(dtype)                                   # (1, C, 1)

        # Pass 2: out = x * coeff + beta, fully tiled and lane-dense.
        out = pl.pallas_call(
            _grn_apply_kernel,
            out_shape=jax.ShapeDtypeStruct((N, C, HWp), dtype),
            grid_spec=pltpu.PrefetchScalarGridSpec(
                num_scalar_prefetch=0,
                grid=(N, n_tiles),
                in_specs=[
                    pl.BlockSpec((1, C, tile_hw), lambda n, t: (n, 0, t)),
                    pl.BlockSpec((1, C, 1), lambda n, t: (n, 0, 0)),
                    pl.BlockSpec((1, C, 1), lambda n, t: (0, 0, 0)),
                ],
                out_specs=pl.BlockSpec((1, C, tile_hw), lambda n, t: (n, 0, t)),
            ),
            compiler_params=pltpu.CompilerParams(
                dimension_semantics=("parallel", "parallel"),
                vmem_limit_bytes=_VMEM_LIMIT_BYTES,
            ),
        )(x, coeff, beta_c)

    if HWp != HW:
        out = out[:, :, :HW]
    return out.reshape(N, C, H, W)


def grn_reference(x, gamma, beta):
    # Pure-JAX reference mirroring the PyTorch forward.
    gx = jnp.sqrt(jnp.sum(x * x, axis=(2, 3), keepdims=True))
    nx = gx / (jnp.mean(gx, axis=1, keepdims=True) + 1e-6)
    return gamma * (x * nx) + beta + x


if __name__ == "__main__":
    key = jax.random.PRNGKey(0)
    k_x, k_g, k_b = jax.random.split(key, 3)

    N, C, H, W = 2, 4, 16, 16
    x = jax.random.normal(k_x, (N, C, H, W), dtype=jnp.float32)

    # nn.Parameter(torch.zeros(1, dim, 1, 1)) -> zeros in the module;
    # use small deterministic non-zero values here so the kernel path is exercised.
    gamma = 0.1 * jax.random.normal(k_g, (1, C, 1, 1), dtype=jnp.float32)
    beta = 0.1 * jax.random.normal(k_b, (1, C, 1, 1), dtype=jnp.float32)

    out = grn_pallas(x, gamma, beta)
    out = jax.block_until_ready(out)

    ref = grn_reference(x, gamma, beta)
    assert out.shape == (N, C, H, W)
    assert jnp.allclose(out, ref, atol=1e-5, rtol=1e-5), "mismatch vs reference"

    print("KERNEL_OK")
</pallas_src>

<mosaic_0001>
module attributes {stable_mosaic.version = 11 : i64} {
  func.func @_grn_slab_kernel(%arg0: i32, %arg1: memref<1x4x256xf32, #tpu.memory_space<vmem>>, %arg2: memref<1x4x1xf32, #tpu.memory_space<vmem>>, %arg3: memref<1x4x1xf32, #tpu.memory_space<vmem>>, %arg4: memref<1x4x256xf32, #tpu.memory_space<vmem>>) attributes {dimension_semantics = [#tpu.dimension_semantics<parallel>], iteration_bounds = array<i64: 2>, scalar_prefetch = 0 : i64, scratch_operands = 0 : i64, tpu.core_type = #tpu.core_type<tc>, window_params = [{transform_indices = @transform_0, window_bounds = array<i64: 1, 4, 256>}, {pipeline_mode = #tpu.pipeline_mode<synchronous>, transform_indices = @transform_1, window_bounds = array<i64: 1, 4, 1>}, {pipeline_mode = #tpu.pipeline_mode<synchronous>, transform_indices = @transform_2, window_bounds = array<i64: 1, 4, 1>}, {transform_indices = @transform_3, window_bounds = array<i64: 1, 4, 256>}]} {
    %c0 = arith.constant 0 : index
    %c0_0 = arith.constant 0 : index
    %c0_1 = arith.constant 0 : index
    %0 = vector.load %arg1[%c0, %c0_0, %c0_1] : memref<1x4x256xf32, #tpu.memory_space<vmem>>, vector<1x4x256xf32>
    %1 = arith.mulf %0, %0 : vector<1x4x256xf32>
    %cst = arith.constant dense<0.000000e+00> : vector<1x4xf32>
    %2 = vector.multi_reduction <add>, %1, %cst [2] : vector<1x4x256xf32> to vector<1x4xf32>
    %3 = vector.shape_cast %2 : vector<1x4xf32> to vector<1x4x1xf32>
    %4 = math.sqrt %3 : vector<1x4x1xf32>
    %cst_2 = arith.constant dense<0.000000e+00> : vector<1x1xf32>
    %5 = vector.multi_reduction <add>, %4, %cst_2 [1] : vector<1x4x1xf32> to vector<1x1xf32>
    %6 = vector.shape_cast %5 : vector<1x1xf32> to vector<1x1x1xf32>
    %cst_3 = arith.constant 4.000000e+00 : f32
    %7 = vector.broadcast %cst_3 : f32 to vector<1x1x1xf32>
    %8 = arith.divf %6, %7 : vector<1x1x1xf32>
    %cst_4 = arith.constant 9.99999997E-7 : f32
    %9 = vector.broadcast %cst_4 : f32 to vector<1x1x1xf32>
    %10 = arith.addf %8, %9 : vector<1x1x1xf32>
    %11 = vector.broadcast %10 : vector<1x1x1xf32> to vector<1x4x1xf32>
    %12 = arith.divf %4, %11 : vector<1x4x1xf32>
    %c0_5 = arith.constant 0 : index
    %c0_6 = arith.constant 0 : index
    %c0_7 = arith.constant 0 : index
    %13 = vector.load %arg2[%c0_5, %c0_6, %c0_7] : memref<1x4x1xf32, #tpu.memory_space<vmem>>, vector<1x4x1xf32>
    %c0_8 = arith.constant 0 : index
    %c0_9 = arith.constant 0 : index
    %c0_10 = arith.constant 0 : index
    %14 = vector.load %arg3[%c0_8, %c0_9, %c0_10] : memref<1x4x1xf32, #tpu.memory_space<vmem>>, vector<1x4x1xf32>
    %15 = arith.mulf %13, %12 : vector<1x4x1xf32>
    %cst_11 = arith.constant 1.000000e+00 : f32
    %16 = vector.broadcast %cst_11 : f32 to vector<1x4x1xf32>
    %17 = arith.addf %15, %16 : vector<1x4x1xf32>
    %18 = vector.broadcast %17 : vector<1x4x1xf32> to vector<1x4x256xf32>
    %19 = arith.mulf %0, %18 : vector<1x4x256xf32>
    %20 = vector.broadcast %14 : vector<1x4x1xf32> to vector<1x4x256xf32>
    %21 = arith.addf %19, %20 : vector<1x4x256xf32>
    %c0_12 = arith.constant 0 : index
    %c0_13 = arith.constant 0 : index
    %c0_14 = arith.constant 0 : index
    %22 = vector.load %arg4[%c0_12, %c0_13, %c0_14] : memref<1x4x256xf32, #tpu.memory_space<vmem>>, vector<1x4x256xf32>
    tpu.vector_store %arg4[%c0_12, %c0_13, %c0_14], %21 {strides = array<i32>} : memref<1x4x256xf32, #tpu.memory_space<vmem>>, vector<1x4x256xf32>,
    return
  }
  func.func @transform_0(%arg0: i32) -> (i32, i32, i32) {
    %c0_i32 = arith.constant 0 : i32
    %c0_i32_0 = arith.constant 0 : i32
    %c0_i32_1 = arith.constant 0 : i32
    return %arg0, %c0_i32, %c0_i32_0 : i32, i32, i32
  }
  func.func @transform_1(%arg0: i32) -> (i32, i32, i32) {
    %c0_i32 = arith.constant 0 : i32
    %c0_i32_0 = arith.constant 0 : i32
    %c0_i32_1 = arith.constant 0 : i32
    %c0_i32_2 = arith.constant 0 : i32
    return %c0_i32, %c0_i32_0, %c0_i32_1 : i32, i32, i32
  }
  func.func @transform_2(%arg0: i32) -> (i32, i32, i32) {
    %c0_i32 = arith.constant 0 : i32
    %c0_i32_0 = arith.constant 0 : i32
    %c0_i32_1 = arith.constant 0 : i32
    %c0_i32_2 = arith.constant 0 : i32
    return %c0_i32, %c0_i32_0, %c0_i32_1 : i32, i32, i32
  }
  func.func @transform_3(%arg0: i32) -> (i32, i32, i32) {
    %c0_i32 = arith.constant 0 : i32
    %c0_i32_0 = arith.constant 0 : i32
    %c0_i32_1 = arith.constant 0 : i32
    return %arg0, %c0_i32, %c0_i32_0 : i32, i32, i32
  }
}

</mosaic_0001>

<llo_original>
// kernel: tpu_custom_call.1
$region0: #{tpu_custom_call.1}
  #allocation0 [shape = 'u32[]', space=smem, size = 0x4, offset = 0x4, fixed_abs, tag = 'smem constant byte address 0x4 - core index']
  #allocation1 [shape = 'u32[144,128]{1,0:T(1,128)}', space=vmem, size = 0x12000, scoped, tag = 'internal scratch']
  %s0 = inlined_call_operand.hbm [shape: f32[2,4,256], index: 0, kind: input, shape index: {}]
  %s1 = inlined_call_operand.vmem [shape: f32[1,4,1], index: 1, kind: input, shape index: {}]
  %s2 = inlined_call_operand.vmem [shape: f32[1,4,1], index: 2, kind: input, shape index: {}]
  %s3 = inlined_call_operand.hbm [shape: f32[2,4,256], index: 3, kind: output, shape index: {}]
  %s4 = sld [smem:[#allocation0]]
  $region49: #{tpu_custom_call.1} parent=0
    _
  %s6 = ssub.s32 1, %s4
  %s7 = scalar_select 0, %s6, %s4
  $region1: #{tpu_custom_call.1} parent=0
    #allocation2 [shape = 'u8[8192]{0}', space=vmem, size = 0x2000, scoped, tag = 'input window, operand 0']
    #allocation3 [shape = 's32[2]{0}', space=sflag, size = 0x8, scoped, tag = 'scoped memory for tpu_custom_call.1']
    #allocation4 [shape = 's32[2]{0}', space=sflag, size = 0x8, scoped, tag = 'scoped memory for tpu_custom_call.1']
    #allocation5 [shape = 'u8[8192]{0}', space=vmem, size = 0x2000, scoped, tag = 'output window, operand 0']
    %8 = vsyncpa [#allocation3], 0
    %s9 = scalar_lea.sflag [#allocation3], 1
    %10 = vsyncpa %s9, 0
    %11 = vsyncpa [#allocation4], 0
    %s12 = scalar_lea.sflag [#allocation4], 1
    %13 = vsyncpa %s12, 0
    loop: start=0, step=1, limit=4
    $region2: #{tpu_custom_call.1} parent=1 // loop_pre_header
      _
    $region3: #{tpu_custom_call.1} parent=1 // loop_header
      %s15 = sphi 0, %s19
      %p16 = scmp.ge.s32.totalorder %s15, 4
      %s25 = sphi 0, %s27
      %s28 = sphi 0, %s25
      %s29 = sphi 0, %s28
      %s45 = sphi 0, %s29
      %s49 = sphi 0, %s49
      %s51 = sphi 0, %s49
      %s52 = sphi 0, %s51
      %s66 = sphi 0, %s52
      %s70 = sphi 0, %s70
      %s72 = sphi 0, %s70
      %s73 = sphi 0, %s72
      %s87 = sphi 0, %s73
      %s93 = sphi 0, %s95
      %s96 = sphi 0, %s93
      %s97 = sphi 0, %s96
      %s113 = sphi 0, %s97
    $region4: #{tpu_custom_call.1} parent=1 // loop_header_branch
      %18 = sbr.rel (%p16) target = $region8
    $region5: #{tpu_custom_call.1} parent=1 // loop_body
      %s20 = ssub.s32 %s15, 1
      %s21 = ssub.s32 %s15, 2
      %s22 = sadd.s32 %s15, 1
      %s23 = ssub.s32 %s15, %s22
      %p24 = scmp.eq.s32.totalorder %s23, 0
      %s26 = sadd.s32 %s25, 1
      %s27 = scalar_select %p24, %s25, %s26
      %p30 = pneg %p24
      %p31 = scmp.eq.s32.totalorder %s15, 1
      %p32 = por %p30, %p31
      %p33 = scmp.ne.s32.totalorder %s25, %s28
      %p34 = scmp.eq.s32.totalorder %s15, 0
      %p35 = por %p33, %p34
      %p36 = scmp.ne.s32.totalorder %s25, %s28
      %p37 = scmp.eq.s32.totalorder %s20, 1
      %p38 = por %p36, %p37
      %p39 = scmp.ne.s32.totalorder %s28, %s29
      %p40 = scmp.eq.s32.totalorder %s20, 0
      %p41 = por %p39, %p40
      %p42 = scmp.ne.s32.totalorder %s28, %s29
      %p43 = scmp.eq.s32.totalorder %s21, 1
      %p44 = por %p42, %p43
      %p46 = scmp.ne.s32.totalorder %s29, %s45
      %p47 = scmp.eq.s32.totalorder %s21, 0
      %p48 = por %p46, %p47
      %s50 = sadd.s32 %s49, 1
      %p53 = scmp.eq.s32.totalorder %s15, 1
      %p54 = scmp.ne.s32.totalorder %s49, %s51
      %p55 = scmp.eq.s32.totalorder %s15, 0
      %p56 = por %p54, %p55
      %p57 = scmp.ne.s32.totalorder %s49, %s51
      %p58 = scmp.eq.s32.totalorder %s20, 1
      %p59 = por %p57, %p58
      %p60 = scmp.ne.s32.totalorder %s51, %s52
      %p61 = scmp.eq.s32.totalorder %s20, 0
      %p62 = por %p60, %p61
      %p63 = scmp.ne.s32.totalorder %s51, %s52
      %p64 = scmp.eq.s32.totalorder %s21, 1
      %p65 = por %p63, %p64
      %p67 = scmp.ne.s32.totalorder %s52, %s66
      %p68 = scmp.eq.s32.totalorder %s21, 0
      %p69 = por %p67, %p68
      %s71 = sadd.s32 %s70, 1
      %p74 = scmp.eq.s32.totalorder %s15, 1
      %p75 = scmp.ne.s32.totalorder %s70, %s72
      %p76 = scmp.eq.s32.totalorder %s15, 0
      %p77 = por %p75, %p76
      %p78 = scmp.ne.s32.totalorder %s70, %s72
      %p79 = scmp.eq.s32.totalorder %s20, 1
      %p80 = por %p78, %p79
      %p81 = scmp.ne.s32.totalorder %s72, %s73
      %p82 = scmp.eq.s32.totalorder %s20, 0
      %p83 = por %p81, %p82
      %p84 = scmp.ne.s32.totalorder %s72, %s73
      %p85 = scmp.eq.s32.totalorder %s21, 1
      %p86 = por %p84, %p85
      %p88 = scmp.ne.s32.totalorder %s73, %s87
      %p89 = scmp.eq.s32.totalorder %s21, 0
      %p90 = por %p88, %p89
      %s91 = ssub.s32 %s15, %s22
      %p92 = scmp.eq.s32.totalorder %s91, 0
      %s94 = sadd.s32 %s93, 1
      %s95 = scalar_select %p92, %s93, %s94
      %p98 = pneg %p92
      %p99 = scmp.eq.s32.totalorder %s15, 1
      %p100 = por %p98, %p99
      %p101 = scmp.ne.s32.totalorder %s93, %s96
      %p102 = scmp.eq.s32.totalorder %s15, 0
      %p103 = por %p101, %p102
      %p104 = scmp.ne.s32.totalorder %s93, %s96
      %p105 = scmp.eq.s32.totalorder %s20, 1
      %p106 = por %p104, %p105
      %p107 = scmp.ne.s32.totalorder %s96, %s97
      %p108 = scmp.eq.s32.totalorder %s20, 0
      %p109 = por %p107, %p108
      %p110 = scmp.ne.s32.totalorder %s96, %s97
      %p111 = scmp.eq.s32.totalorder %s21, 1
      %p112 = por %p110, %p111
      %p114 = scmp.ne.s32.totalorder %s97, %s113
      %p115 = scmp.eq.s32.totalorder %s21, 0
      %p116 = por %p114, %p115
      %p117 = scmp.le.s32.totalorder 1, %s15
      %p118 = scmp.lt.s32.totalorder %s15, 3
      %p119 = pnand %p117, %p118
      %p120 = pneg %p119
      // Predicated region
      $region9: #{tpu_custom_call.1} parent=5 // pred_check
        _
      $region10: #{tpu_custom_call.1} parent=5 // pred_check_branch
        %122 = sbr.rel (%p119) target = $region12
      $region11: #{tpu_custom_call.1} parent=5 // pred_region
        %s123 = ssub.s32 %s15, 1
        // Predicated region
        $region13: #{tpu_custom_call.1} parent=11 // pred_check
          %p124 = pneg %p62
        $region14: #{tpu_custom_call.1} parent=11 // pred_check_branch
          %126 = sbr.rel (%p124) target = $region16
        $region15: #{tpu_custom_call.1} parent=11 // pred_region
          _
        $region16: #{tpu_custom_call.1} parent=11 // pred_fallthru
          _
        // Predicated region
        $region17: #{tpu_custom_call.1} parent=11 // pred_check
          %p127 = pneg %p83
        $region18: #{tpu_custom_call.1} parent=11 // pred_check_branch
          %129 = sbr.rel (%p127) target = $region20
        $region19: #{tpu_custom_call.1} parent=11 // pred_region
          _
        $region20: #{tpu_custom_call.1} parent=11 // pred_fallthru
          _
      $region12: #{tpu_custom_call.1} parent=5 // pred_fallthru
        _
      %p130 = scmp.lt.s32.totalorder %s15, 2
      // Predicated region
      $region21: #{tpu_custom_call.1} parent=5 // pred_check
        %p131 = pneg %p130
      $region22: #{tpu_custom_call.1} parent=5 // pred_check_branch
        %133 = sbr.rel (%p131) target = $region24
      $region23: #{tpu_custom_call.1} parent=5 // pred_region
        // Predicated region
        $region25: #{tpu_custom_call.1} parent=23 // pred_check
          %p134 = pneg %p35
        $region26: #{tpu_custom_call.1} parent=23 // pred_check_branch
          %136 = sbr.rel (%p134) target = $region28
        $region27: #{tpu_custom_call.1} parent=23 // pred_region
          %s137 = sand.u32 %s25, 1
          %s138 = scalar_lea.sflag [#allocation3], %s137
          %s139 = sand.u32 %s25, 1
          %s140 = smul.addr %s139, 8
          %s141 = scalar_lea.vmem [#allocation2], %s140
          %s143 = ssub.s32 128, 128
          %144 = vsyncadd %s138, %s143
          %s145 = smul.addr %s15, 2
          %s146 = smul.addr %s145, 64
          %s147 = scalar_lea.hbm %s0, %s146
          %s149 = sshll.u32 %s141, 4
          %s150 = int_to_ptr.vmem [resolvable:$true] %s149
          %152 = dma.hbm_to_vmem [thread:$0]  %s147, 128, %s150, %s138
        $region28: #{tpu_custom_call.1} parent=23 // pred_fallthru
          _
      $region24: #{tpu_custom_call.1} parent=5 // pred_fallthru
        _
      %p153 = scmp.le.s32.totalorder 1, %s15
      %p154 = scmp.lt.s32.totalorder %s15, 3
      %p155 = pnand %p153, %p154
      %p156 = pneg %p155
      // Predicated region
      $region29: #{tpu_custom_call.1} parent=5 // pred_check
        _
      $region30: #{tpu_custom_call.1} parent=5 // pred_check_branch
        %158 = sbr.rel (%p155) target = $region32
      $region31: #{tpu_custom_call.1} parent=5 // pred_region
        %s159 = ssub.s32 %s15, 1
        %s160 = sand.u32 %s28, 1
        %s161 = scalar_lea.sflag [#allocation3], %s160
        %s162 = sand.u32 %s28, 1
        %s163 = smul.addr %s162, 8
        %s164 = scalar_lea.vmem [#allocation2], %s163
        // Predicated region
        $region33: #{tpu_custom_call.1} parent=31 // pred_check
          %p165 = pneg %p41
        $region34: #{tpu_custom_call.1} parent=31 // pred_check_branch
          %167 = sbr.rel (%p165) target = $region36
        $region35: #{tpu_custom_call.1} parent=31 // pred_region
          %168 = dma.done %s161, 128
        $region36: #{tpu_custom_call.1} parent=31 // pred_fallthru
          _
        %s169 = sand.u32 %s28, 1
        %s170 = scalar_lea.sflag [#allocation3], %s169
        %s171 = sand.u32 %s28, 1
        %s172 = smul.addr %s171, 8
        %s173 = scalar_lea.vmem [#allocation2], %s172
        %p174 = pneg %p41
        %p175 = pneg %p38
        %p176 = pneg %p62
        %p177 = pneg %p59
        %p178 = pneg %p83
        %p179 = pneg %p80
        %p180 = pneg %p109
        %p181 = pneg %p106
        %s182 = sand.u32 %s96, 1
        %s183 = scalar_lea.sflag [#allocation4], %s182
        %s184 = sand.u32 %s96, 1
        %s185 = smul.addr %s184, 8
        %s186 = scalar_lea.vmem [#allocation5], %s185
        %v187 = vld [vmem:[%s164] sm:$0xff]
        %v188 = vmul.f32 %v187, %v187
        %v190 = vcombine.high %v188, %v188
        %vm192 = vcmask 1043456
        %v193 = vsel %vm192, %v188, 0.0
        %v194 = vsel %vm192, %v190, 0.0
        %v195 = vadd.f32 %v193, %v194
        %196 = vadd.xlane.f32.xlu0 %v195
        %v197 = vpop.xlane.xlu0 %196
        %v198 = vrsqrt.pop %v197
        %v199 = vmul.f32 %v197, %v198
        %vm200 = vcmp.eq.f32.partialorder %v197, inf
        %v201 = vsel %vm200, %v197, %v199
        %vm202 = vcmp.eq.f32.partialorder %v197, 0.0
        %v203 = vand.u32 %v197, 2147483648
        %v204 = vsel %vm202, %v203, %v201
        %v205 = vsel %vm192, %v204, 0.0
        %v206 = vrot.slane %v205, 4
        %v207 = vadd.f32 %v205, %v206
        %v208 = vrot.slane %v207, 2
        %v209 = vadd.f32 %v207, %v208
        %v210 = vrot.slane %v209, 1
        %v211 = vadd.f32 %v209, %v210
        %v212 = vrcp.pop 4.0
        %v213 = vmul.f32 %v211, %v212
        %v214 = vadd.f32 %v213, 1e-06
        %v215 = vrcp.pop %v214
        %v216 = vmul.f32 %v204, %v215
        %v217 = vld [vmem:[%s1] sm:$0xf]
        %v218 = vld [vmem:[%s2] sm:$0xf]
        %v219 = vmul.f32 %v217, %v216
        %v220 = vadd.f32 %v219, 1.0
        %222 = vset.pattern.permute.xlu0 0
        %223 = vperm.xlu0 %222, %v220
        %v224 = vpop.permute.xlu0 %223
        %v226 = vunpack.c.l.s4 839922192
        %v227 = vunpack.c.0.s8 %v226
        %v228 = vlaneseq
        %v229 = vshrl.u32 %v228, 7
        %v230 = vsub.s32 %v227, %v229
        %v231 = vrot.slane %v224, %v230
        %v233 = vmul.f32 %v187, %v231
        %235 = vset.pattern.permute.xlu0 0
        %236 = vperm.xlu0 %235, %v218
        %v237 = vpop.permute.xlu0 %236
        %v239 = vunpack.c.l.s4 839922192
        %v240 = vunpack.c.0.s8 %v239
        %v241 = vlaneseq
        %v242 = vshrl.u32 %v241, 7
        %v243 = vsub.s32 %v240, %v242
        %v244 = vrot.slane %v237, %v243
        %v246 = vadd.f32 %v233, %v244
        %247 = vst [vmem:[%s186] sm:$0xff] %v246
        %s248 = sand.u32 %s96, 1
        %s249 = scalar_lea.sflag [#allocation4], %s248
        %s250 = sand.u32 %s96, 1
        %s251 = smul.addr %s250, 8
        %s252 = scalar_lea.vmem [#allocation5], %s251
        // Predicated region
        $region37: #{tpu_custom_call.1} parent=31 // pred_check
          %p253 = pneg %p106
        $region38: #{tpu_custom_call.1} parent=31 // pred_check_branch
          %255 = sbr.rel (%p253) target = $region40
        $region39: #{tpu_custom_call.1} parent=31 // pred_region
          %s257 = ssub.s32 128, 128
          %258 = vsyncadd %s249, %s257
          %s259 = smul.addr %s20, 2
          %s260 = smul.addr %s259, 64
          %s261 = scalar_lea.hbm %s3, %s260
          %s263 = sshll.u32 %s252, 4
          %s264 = int_to_ptr.vmem [resolvable:$true] %s263
          %266 = dma.vmem_to_hbm [thread:$0]  %s264, 128, %s261, %s249
        $region40: #{tpu_custom_call.1} parent=31 // pred_fallthru
          _
      $region32: #{tpu_custom_call.1} parent=5 // pred_fallthru
        _
      %p267 = scmp.le.s32.totalorder 2, %s15
      // Predicated region
      $region41: #{tpu_custom_call.1} parent=5 // pred_check
        %p268 = pneg %p267
      $region42: #{tpu_custom_call.1} parent=5 // pred_check_branch
        %270 = sbr.rel (%p268) target = $region44
      $region43: #{tpu_custom_call.1} parent=5 // pred_region
        %s271 = ssub.s32 %s15, 2
        // Predicated region
        $region45: #{tpu_custom_call.1} parent=43 // pred_check
          %p272 = pneg %p112
        $region46: #{tpu_custom_call.1} parent=43 // pred_check_branch
          %274 = sbr.rel (%p272) target = $region48
        $region47: #{tpu_custom_call.1} parent=43 // pred_region
          %s275 = sand.u32 %s97, 1
          %s276 = scalar_lea.sflag [#allocation4], %s275
          %s277 = sand.u32 %s97, 1
          %s278 = smul.addr %s277, 8
          %s279 = scalar_lea.vmem [#allocation5], %s278
          %280 = dma.done %s276, 128
        $region48: #{tpu_custom_call.1} parent=43 // pred_fallthru
          _
      $region44: #{tpu_custom_call.1} parent=5 // pred_fallthru
        _
    $region6: #{tpu_custom_call.1} parent=1 // loop_footer
      %s19 = sadd.s32 1, %s15
    $region7: #{tpu_custom_call.1} parent=1 // loop_footer_branch
      %14 = sbr.rel target = $region3
    $region8: #{tpu_custom_call.1} parent=1 // loop_exit
      _
    %281 = vsyncpa [#allocation3], 1
    %s282 = scalar_lea.sflag [#allocation3], 1
    %283 = vsyncpa %s282, 1
    %284 = vsyncpa [#allocation4], 1
    %s285 = scalar_lea.sflag [#allocation4], 1
    %286 = vsyncpa %s285, 1

</llo_original>
